<compile_context>
chip_gen: v6e
topology: v6e:2x2x1
jax: 0.10.0
libtpu: 0.0.40
codegen_flags: <defaults>
</compile_context>

<pallas_src>
import functools

import jax
import jax.numpy as jnp
from jax.experimental import pallas as pl
from jax.experimental.pallas import tpu as pltpu

# Default norse LIFParameters (as used by ConstantCurrentLIFEncoderCell)
DT = 0.001
TAU_MEM_INV = 1.0 / 1e-2   # 100.0
V_LEAK = 0.0
V_TH = 1.0
V_RESET = 0.0

_LANE = 128
_SUBLANE = 8


def _lif_encode_kernel(x_ref, out_ref, v_ref, *, t_fused: int):
    # x_ref   : (tile_rows, 128)           constant input current tile
    # out_ref : (t_fused, tile_rows, 128)  spikes for t_fused consecutive steps
    # v_ref   : (tile_rows, 128) VMEM      membrane voltage carried across time blocks
    #
    # Re-initialize the voltage at the first time-block of each spatial tile.
    @pl.when(pl.program_id(1) == 0)
    def _():
        v_ref[...] = jnp.zeros_like(v_ref)

    alpha = DT * TAU_MEM_INV                        # 0.1
    decay = jnp.float32(1.0 - alpha)
    # Input current is constant across time -> hoist the drive term out of the loop.
    # v + a*((v_leak - v) + x)  ==  v*(1 - a) + a*(x + v_leak)
    drive = jnp.float32(alpha) * (x_ref[...] + V_LEAK)

    v = v_ref[...]                                  # carry voltage in registers
    for t in range(t_fused):                        # static unroll over fused steps
        v = v * decay + drive
        z = v > V_TH                                # heaviside with heaviside(0) = 0
        out_ref[t, :, :] = z.astype(out_ref.dtype)  # float32 contract of the module
        v = jnp.where(z, jnp.float32(V_RESET), v)   # reset: v - z*(v - v_reset)
    v_ref[...] = v                                  # single writeback per block


def _plan_tiling(rows: int, steps: int, vmem_block_budget: int):
    """Pick (tile_rows, n_spatial, t_fused, n_time) for the (spatial, time) grid."""
    # Spatial split: prefer 2 tiles so v7x megacore can use both TensorCores.
    # Each tile must keep a sublane-aligned (multiple of 8) row count.
    if rows >= 2 * _SUBLANE and rows % (2 * _SUBLANE) == 0:
        n_spatial = 2
    else:
        n_spatial = 1
    tile_rows = rows // n_spatial

    bytes_per_step = tile_rows * _LANE * 4          # one (tile_rows, 128) f32 slab
    # Split further spatially if even a single fused step would blow the budget.
    while bytes_per_step > vmem_block_budget and tile_rows % (2 * _SUBLANE) == 0:
        n_spatial *= 2
        tile_rows //= 2
        bytes_per_step = tile_rows * _LANE * 4

    # Fuse as many time steps per grid iteration as the budget allows (must divide steps).
    t_fused = 1
    for t in range(steps, 0, -1):
        if steps % t == 0 and t * bytes_per_step <= vmem_block_budget:
            t_fused = t
            break
    return tile_rows, n_spatial, t_fused, steps // t_fused


def current_encode(x: jax.Array, steps: int,
                   vmem_block_budget: int = 6 * 1024 * 1024) -> jax.Array:
    """Pallas equivalent of CurrentEncode(steps).forward(x); x is (c, h, w)."""
    c, h, w = x.shape
    n = c * h * w

    # Lane-dense layout: flatten and pad to a (rows, 128) slab with rows % 8 == 0.
    pad_unit = _SUBLANE * _LANE
    n_pad = ((n + pad_unit - 1) // pad_unit) * pad_unit
    xf = x.reshape(-1).astype(jnp.float32)
    if n_pad != n:
        xf = jnp.pad(xf, (0, n_pad - n))
    rows = n_pad // _LANE
    x2d = xf.reshape(rows, _LANE)

    tile_rows, n_spatial, t_fused, n_time = _plan_tiling(rows, steps, vmem_block_budget)

    out = pl.pallas_call(
        functools.partial(_lif_encode_kernel, t_fused=t_fused),
        out_shape=jax.ShapeDtypeStruct((steps, rows, _LANE), jnp.float32),
        grid_spec=pltpu.PrefetchScalarGridSpec(
            num_scalar_prefetch=0,
            grid=(n_spatial, n_time),
            in_specs=[pl.BlockSpec((tile_rows, _LANE), lambda i, j: (i, 0))],
            out_specs=pl.BlockSpec((t_fused, tile_rows, _LANE), lambda i, j: (j, i, 0)),
            scratch_shapes=[pltpu.VMEM((tile_rows, _LANE), jnp.float32)],
        ),
        compiler_params=pltpu.CompilerParams(
            # Spatial tiles are independent (megacore on v7x); time carries the recurrence.
            dimension_semantics=("parallel", "arbitrary"),
        ),
    )(x2d)

    return out.reshape(steps, n_pad)[:, :n].reshape(steps, c, h, w)


def _reference(x, steps):
    # Pure-JAX reference of the encoder recurrence. Uses the same (algebraically
    # identical) strength-reduced form as the kernel:
    #   v + dt*tau_mem_inv*((v_leak - v) + x)  ==  v*(1 - a) + a*(x + v_leak)
    #   v - z*(v - v_reset)                    ==  where(z, v_reset, v)
    alpha = DT * TAU_MEM_INV
    decay = jnp.float32(1.0 - alpha)
    drive = jnp.float32(alpha) * (x.astype(jnp.float32) + V_LEAK)
    v = jnp.zeros_like(drive)
    outs = []
    for _ in range(steps):
        v = v * decay + drive
        z = v > V_TH
        outs.append(z.astype(jnp.float32))
        v = jnp.where(z, jnp.float32(V_RESET), v)
    return jnp.stack(outs, axis=0)


if __name__ == "__main__":
    key = jax.random.PRNGKey(0)

    def check(shape, steps, scale, budget=6 * 1024 * 1024):
        k = jax.random.fold_in(key, shape[0] * 1000 + steps)
        x = jax.random.uniform(k, shape, dtype=jnp.float32) * scale
        events = jax.block_until_ready(current_encode(x, steps, vmem_block_budget=budget))
        ref = _reference(x, steps)
        assert events.shape == (steps,) + shape
        assert events.dtype == jnp.float32
        assert jnp.allclose(events, ref), f"mismatch for shape={shape} steps={steps}"

    # Small shape from the module spec: whole op collapses to a single grid point.
    check((4, 16, 16), 8, 20.0)
    # Larger shape: exercises the 2-way "parallel" spatial split.
    check((8, 32, 64), 12, 20.0)
    # Element count not a multiple of 8*128: exercises padding / unpadding.
    check((3, 10, 20), 8, 20.0)
    # Tiny VMEM budget: forces the time axis to split (voltage carried via scratch).
    check((4, 16, 16), 8, 20.0, budget=8192)

    print("KERNEL_OK")
</pallas_src>

<mosaic_0001>
module attributes {stable_mosaic.version = 11 : i64} {
  func.func @_lif_encode_kernel(%arg0: i32, %arg1: i32, %arg2: memref<8x128xf32, #tpu.memory_space<vmem>>, %arg3: memref<8x8x128xf32, #tpu.memory_space<vmem>>, %arg4: memref<8x128xf32, #tpu.memory_space<vmem>>) attributes {dimension_semantics = [#tpu.dimension_semantics<parallel>, #tpu.dimension_semantics<arbitrary>], iteration_bounds = array<i64: 1, 1>, scalar_prefetch = 0 : i64, scratch_operands = 1 : i64, tpu.core_type = #tpu.core_type<tc>, window_params = [{transform_indices = @transform_0, window_bounds = array<i64: 8, 128>}, {transform_indices = @transform_1, window_bounds = array<i64: 8, 8, 128>}]} {
    %c0_i32 = arith.constant 0 : i32
    %0 = arith.cmpi eq, %arg1, %c0_i32 : i32
    %1 = arith.extui %0 : i1 to i32
    %c0_i32_0 = arith.constant 0 : i32
    %2 = arith.cmpi ne, %1, %c0_i32_0 : i32
    scf.if %2 {
      %cst_48 = arith.constant 0.000000e+00 : f32
      %106 = vector.broadcast %cst_48 : f32 to vector<8x128xf32>
      %c0_49 = arith.constant 0 : index
      %c0_50 = arith.constant 0 : index
      %107 = vector.load %arg4[%c0_49, %c0_50] : memref<8x128xf32, #tpu.memory_space<vmem>>, vector<8x128xf32>
      tpu.vector_store %arg4[%c0_49, %c0_50], %106 {strides = array<i32>} : memref<8x128xf32, #tpu.memory_space<vmem>>, vector<8x128xf32>,
    } else {
    }
    %c0 = arith.constant 0 : index
    %c0_1 = arith.constant 0 : index
    %3 = vector.load %arg2[%c0, %c0_1] : memref<8x128xf32, #tpu.memory_space<vmem>>, vector<8x128xf32>
    %cst = arith.constant 0.000000e+00 : f32
    %4 = vector.broadcast %cst : f32 to vector<8x128xf32>
    %5 = arith.addf %3, %4 : vector<8x128xf32>
    %cst_2 = arith.constant 1.000000e-01 : f32
    %6 = vector.broadcast %cst_2 : f32 to vector<8x128xf32>
    %7 = arith.mulf %6, %5 : vector<8x128xf32>
    %c0_3 = arith.constant 0 : index
    %c0_4 = arith.constant 0 : index
    %8 = vector.load %arg4[%c0_3, %c0_4] : memref<8x128xf32, #tpu.memory_space<vmem>>, vector<8x128xf32>
    %cst_5 = arith.constant 0.899999976 : f32
    %9 = vector.broadcast %cst_5 : f32 to vector<8x128xf32>
    %10 = arith.mulf %8, %9 : vector<8x128xf32>
    %11 = arith.addf %10, %7 : vector<8x128xf32>
    %cst_6 = arith.constant 1.000000e+00 : f32
    %12 = vector.broadcast %cst_6 : f32 to vector<8x128xf32>
    %13 = arith.cmpf ogt, %11, %12 : vector<8x128xf32>
    %14 = arith.extui %13 : vector<8x128xi1> to vector<8x128xi32>
    %15 = arith.sitofp %14 : vector<8x128xi32> to vector<8x128xf32>
    %c0_7 = arith.constant 0 : index
    %c0_8 = arith.constant 0 : index
    %c0_9 = arith.constant 0 : index
    %16 = vector.load %arg3[%c0_7, %c0_8, %c0_9] : memref<8x8x128xf32, #tpu.memory_space<vmem>>, vector<1x8x128xf32>
    %17 = vector.shape_cast %16 : vector<1x8x128xf32> to vector<8x128xf32>
    %18 = vector.shape_cast %15 : vector<8x128xf32> to vector<1x8x128xf32>
    tpu.vector_store %arg3[%c0_7, %c0_8, %c0_9], %18 {strides = array<i32>} : memref<8x8x128xf32, #tpu.memory_space<vmem>>, vector<1x8x128xf32>,
    %cst_10 = arith.constant 0.000000e+00 : f32
    %19 = vector.broadcast %cst_10 : f32 to vector<8x128xf32>
    %20 = arith.select %13, %19, %11 : vector<8x128xi1>, vector<8x128xf32>
    %cst_11 = arith.constant 0.899999976 : f32
    %21 = vector.broadcast %cst_11 : f32 to vector<8x128xf32>
    %22 = arith.mulf %20, %21 : vector<8x128xf32>
    %23 = arith.addf %22, %7 : vector<8x128xf32>
    %cst_12 = arith.constant 1.000000e+00 : f32
    %24 = vector.broadcast %cst_12 : f32 to vector<8x128xf32>
    %25 = arith.cmpf ogt, %23, %24 : vector<8x128xf32>
    %26 = arith.extui %25 : vector<8x128xi1> to vector<8x128xi32>
    %27 = arith.sitofp %26 : vector<8x128xi32> to vector<8x128xf32>
    %c1 = arith.constant 1 : index
    %c0_13 = arith.constant 0 : index
    %c0_14 = arith.constant 0 : index
    %28 = vector.load %arg3[%c1, %c0_13, %c0_14] : memref<8x8x128xf32, #tpu.memory_space<vmem>>, vector<1x8x128xf32>
    %29 = vector.shape_cast %28 : vector<1x8x128xf32> to vector<8x128xf32>
    %30 = vector.shape_cast %27 : vector<8x128xf32> to vector<1x8x128xf32>
    tpu.vector_store %arg3[%c1, %c0_13, %c0_14], %30 {strides = array<i32>} : memref<8x8x128xf32, #tpu.memory_space<vmem>>, vector<1x8x128xf32>,
    %cst_15 = arith.constant 0.000000e+00 : f32
    %31 = vector.broadcast %cst_15 : f32 to vector<8x128xf32>
    %32 = arith.select %25, %31, %23 : vector<8x128xi1>, vector<8x128xf32>
    %cst_16 = arith.constant 0.899999976 : f32
    %33 = vector.broadcast %cst_16 : f32 to vector<8x128xf32>
    %34 = arith.mulf %32, %33 : vector<8x128xf32>
    %35 = arith.addf %34, %7 : vector<8x128xf32>
    %cst_17 = arith.constant 1.000000e+00 : f32
    %36 = vector.broadcast %cst_17 : f32 to vector<8x128xf32>
    %37 = arith.cmpf ogt, %35, %36 : vector<8x128xf32>
    %38 = arith.extui %37 : vector<8x128xi1> to vector<8x128xi32>
    %39 = arith.sitofp %38 : vector<8x128xi32> to vector<8x128xf32>
    %c2 = arith.constant 2 : index
    %c0_18 = arith.constant 0 : index
    %c0_19 = arith.constant 0 : index
    %40 = vector.load %arg3[%c2, %c0_18, %c0_19] : memref<8x8x128xf32, #tpu.memory_space<vmem>>, vector<1x8x128xf32>
    %41 = vector.shape_cast %40 : vector<1x8x128xf32> to vector<8x128xf32>
    %42 = vector.shape_cast %39 : vector<8x128xf32> to vector<1x8x128xf32>
    tpu.vector_store %arg3[%c2, %c0_18, %c0_19], %42 {strides = array<i32>} : memref<8x8x128xf32, #tpu.memory_space<vmem>>, vector<1x8x128xf32>,
    %cst_20 = arith.constant 0.000000e+00 : f32
    %43 = vector.broadcast %cst_20 : f32 to vector<8x128xf32>
    %44 = arith.select %37, %43, %35 : vector<8x128xi1>, vector<8x128xf32>
    %cst_21 = arith.constant 0.899999976 : f32
    %45 = vector.broadcast %cst_21 : f32 to vector<8x128xf32>
    %46 = arith.mulf %44, %45 : vector<8x128xf32>
    %47 = arith.addf %46, %7 : vector<8x128xf32>
    %cst_22 = arith.constant 1.000000e+00 : f32
    %48 = vector.broadcast %cst_22 : f32 to vector<8x128xf32>
    %49 = arith.cmpf ogt, %47, %48 : vector<8x128xf32>
    %50 = arith.extui %49 : vector<8x128xi1> to vector<8x128xi32>
    %51 = arith.sitofp %50 : vector<8x128xi32> to vector<8x128xf32>
    %c3 = arith.constant 3 : index
    %c0_23 = arith.constant 0 : index
    %c0_24 = arith.constant 0 : index
    %52 = vector.load %arg3[%c3, %c0_23, %c0_24] : memref<8x8x128xf32, #tpu.memory_space<vmem>>, vector<1x8x128xf32>
    %53 = vector.shape_cast %52 : vector<1x8x128xf32> to vector<8x128xf32>
    %54 = vector.shape_cast %51 : vector<8x128xf32> to vector<1x8x128xf32>
    tpu.vector_store %arg3[%c3, %c0_23, %c0_24], %54 {strides = array<i32>} : memref<8x8x128xf32, #tpu.memory_space<vmem>>, vector<1x8x128xf32>,
    %cst_25 = arith.constant 0.000000e+00 : f32
    %55 = vector.broadcast %cst_25 : f32 to vector<8x128xf32>
    %56 = arith.select %49, %55, %47 : vector<8x128xi1>, vector<8x128xf32>
    %cst_26 = arith.constant 0.899999976 : f32
    %57 = vector.broadcast %cst_26 : f32 to vector<8x128xf32>
    %58 = arith.mulf %56, %57 : vector<8x128xf32>
    %59 = arith.addf %58, %7 : vector<8x128xf32>
    %cst_27 = arith.constant 1.000000e+00 : f32
    %60 = vector.broadcast %cst_27 : f32 to vector<8x128xf32>
    %61 = arith.cmpf ogt, %59, %60 : vector<8x128xf32>
    %62 = arith.extui %61 : vector<8x128xi1> to vector<8x128xi32>
    %63 = arith.sitofp %62 : vector<8x128xi32> to vector<8x128xf32>
    %c4 = arith.constant 4 : index
    %c0_28 = arith.constant 0 : index
    %c0_29 = arith.constant 0 : index
    %64 = vector.load %arg3[%c4, %c0_28, %c0_29] : memref<8x8x128xf32, #tpu.memory_space<vmem>>, vector<1x8x128xf32>
    %65 = vector.shape_cast %64 : vector<1x8x128xf32> to vector<8x128xf32>
    %66 = vector.shape_cast %63 : vector<8x128xf32> to vector<1x8x128xf32>
    tpu.vector_store %arg3[%c4, %c0_28, %c0_29], %66 {strides = array<i32>} : memref<8x8x128xf32, #tpu.memory_space<vmem>>, vector<1x8x128xf32>,
    %cst_30 = arith.constant 0.000000e+00 : f32
    %67 = vector.broadcast %cst_30 : f32 to vector<8x128xf32>
    %68 = arith.select %61, %67, %59 : vector<8x128xi1>, vector<8x128xf32>
    %cst_31 = arith.constant 0.899999976 : f32
    %69 = vector.broadcast %cst_31 : f32 to vector<8x128xf32>
    %70 = arith.mulf %68, %69 : vector<8x128xf32>
    %71 = arith.addf %70, %7 : vector<8x128xf32>
    %cst_32 = arith.constant 1.000000e+00 : f32
    %72 = vector.broadcast %cst_32 : f32 to vector<8x128xf32>
    %73 = arith.cmpf ogt, %71, %72 : vector<8x128xf32>
    %74 = arith.extui %73 : vector<8x128xi1> to vector<8x128xi32>
    %75 = arith.sitofp %74 : vector<8x128xi32> to vector<8x128xf32>
    %c5 = arith.constant 5 : index
    %c0_33 = arith.constant 0 : index
    %c0_34 = arith.constant 0 : index
    %76 = vector.load %arg3[%c5, %c0_33, %c0_34] : memref<8x8x128xf32, #tpu.memory_space<vmem>>, vector<1x8x128xf32>
    %77 = vector.shape_cast %76 : vector<1x8x128xf32> to vector<8x128xf32>
    %78 = vector.shape_cast %75 : vector<8x128xf32> to vector<1x8x128xf32>
    tpu.vector_store %arg3[%c5, %c0_33, %c0_34], %78 {strides = array<i32>} : memref<8x8x128xf32, #tpu.memory_space<vmem>>, vector<1x8x128xf32>,
    %cst_35 = arith.constant 0.000000e+00 : f32
    %79 = vector.broadcast %cst_35 : f32 to vector<8x128xf32>
    %80 = arith.select %73, %79, %71 : vector<8x128xi1>, vector<8x128xf32>
    %cst_36 = arith.constant 0.899999976 : f32
    %81 = vector.broadcast %cst_36 : f32 to vector<8x128xf32>
    %82 = arith.mulf %80, %81 : vector<8x128xf32>
    %83 = arith.addf %82, %7 : vector<8x128xf32>
    %cst_37 = arith.constant 1.000000e+00 : f32
    %84 = vector.broadcast %cst_37 : f32 to vector<8x128xf32>
    %85 = arith.cmpf ogt, %83, %84 : vector<8x128xf32>
    %86 = arith.extui %85 : vector<8x128xi1> to vector<8x128xi32>
    %87 = arith.sitofp %86 : vector<8x128xi32> to vector<8x128xf32>
    %c6 = arith.constant 6 : index
    %c0_38 = arith.constant 0 : index
    %c0_39 = arith.constant 0 : index
    %88 = vector.load %arg3[%c6, %c0_38, %c0_39] : memref<8x8x128xf32, #tpu.memory_space<vmem>>, vector<1x8x128xf32>
    %89 = vector.shape_cast %88 : vector<1x8x128xf32> to vector<8x128xf32>
    %90 = vector.shape_cast %87 : vector<8x128xf32> to vector<1x8x128xf32>
    tpu.vector_store %arg3[%c6, %c0_38, %c0_39], %90 {strides = array<i32>} : memref<8x8x128xf32, #tpu.memory_space<vmem>>, vector<1x8x128xf32>,
    %cst_40 = arith.constant 0.000000e+00 : f32
    %91 = vector.broadcast %cst_40 : f32 to vector<8x128xf32>
    %92 = arith.select %85, %91, %83 : vector<8x128xi1>, vector<8x128xf32>
    %cst_41 = arith.constant 0.899999976 : f32
    %93 = vector.broadcast %cst_41 : f32 to vector<8x128xf32>
    %94 = arith.mulf %92, %93 : vector<8x128xf32>
    %95 = arith.addf %94, %7 : vector<8x128xf32>
    %cst_42 = arith.constant 1.000000e+00 : f32
    %96 = vector.broadcast %cst_42 : f32 to vector<8x128xf32>
    %97 = arith.cmpf ogt, %95, %96 : vector<8x128xf32>
    %98 = arith.extui %97 : vector<8x128xi1> to vector<8x128xi32>
    %99 = arith.sitofp %98 : vector<8x128xi32> to vector<8x128xf32>
    %c7 = arith.constant 7 : index
    %c0_43 = arith.constant 0 : index
    %c0_44 = arith.constant 0 : index
    %100 = vector.load %arg3[%c7, %c0_43, %c0_44] : memref<8x8x128xf32, #tpu.memory_space<vmem>>, vector<1x8x128xf32>
    %101 = vector.shape_cast %100 : vector<1x8x128xf32> to vector<8x128xf32>
    %102 = vector.shape_cast %99 : vector<8x128xf32> to vector<1x8x128xf32>
    tpu.vector_store %arg3[%c7, %c0_43, %c0_44], %102 {strides = array<i32>} : memref<8x8x128xf32, #tpu.memory_space<vmem>>, vector<1x8x128xf32>,
    %cst_45 = arith.constant 0.000000e+00 : f32
    %103 = vector.broadcast %cst_45 : f32 to vector<8x128xf32>
    %104 = arith.select %97, %103, %95 : vector<8x128xi1>, vector<8x128xf32>
    %c0_46 = arith.constant 0 : index
    %c0_47 = arith.constant 0 : index
    %105 = vector.load %arg4[%c0_46, %c0_47] : memref<8x128xf32, #tpu.memory_space<vmem>>, vector<8x128xf32>
    tpu.vector_store %arg4[%c0_46, %c0_47], %104 {strides = array<i32>} : memref<8x128xf32, #tpu.memory_space<vmem>>, vector<8x128xf32>,
    return
  }
  func.func @transform_0(%arg0: i32, %arg1: i32) -> (i32, i32) {
    %c0_i32 = arith.constant 0 : i32
    %c0_i32_0 = arith.constant 0 : i32
    return %arg0, %c0_i32 : i32, i32
  }
  func.func @transform_1(%arg0: i32, %arg1: i32) -> (i32, i32, i32) {
    %c0_i32 = arith.constant 0 : i32
    %c0_i32_0 = arith.constant 0 : i32
    return %arg1, %arg0, %c0_i32 : i32, i32, i32
  }
}

</mosaic_0001>

<llo_original>
// kernel: tpu_custom_call.1
$region0: #{tpu_custom_call.1}
  #allocation0 [shape = 'u32[]', space=smem, size = 0x4, offset = 0x4, fixed_abs, tag = 'smem constant byte address 0x4 - core index']
  #allocation1 [shape = 'u32[144,128]{1,0:T(1,128)}', space=vmem, size = 0x12000, scoped, tag = 'internal scratch']
  #allocation2 [shape = 'f32[8,128]{1,0:T(8,128)}', space=vmem, size = 0x1000, scoped, tag = 'scratch operand']
  %s0 = inlined_call_operand.hbm [shape: f32[8,128], index: 0, kind: input, shape index: {}]
  %s1 = inlined_call_operand.hbm [shape: f32[8,8,128], index: 1, kind: output, shape index: {}]
  %s2 = sld [smem:[#allocation0]]
  $region22: #{tpu_custom_call.1} parent=0
    _
  %s4 = ssub.s32 1, %s2
  %s5 = scalar_select 0, %s4, %s2
  $region1: #{tpu_custom_call.1} parent=0
    #allocation3 [shape = 'u8[4096]{0}', space=vmem, size = 0x1000, scoped, tag = 'input window, operand 0, single buffered']
    #allocation4 [shape = 's32[1]{0}', space=sflag, size = 0x4, scoped, tag = 'scoped memory for tpu_custom_call.1']
    #allocation5 [shape = 's32[1]{0}', space=sflag, size = 0x4, scoped, tag = 'scoped memory for tpu_custom_call.1']
    #allocation6 [shape = 'u8[32768]{0}', space=vmem, size = 0x8000, scoped, tag = 'output window, operand 0, single buffered']
    %6 = vsyncpa [#allocation4], 0
    %7 = vsyncpa [#allocation5], 0
    // Predicated region
    $region2: #{tpu_custom_call.1} parent=1 // pred_check
      _
    $region3: #{tpu_custom_call.1} parent=1 // pred_check_branch
      %9 = sbr.rel (0) target = $region5
    $region4: #{tpu_custom_call.1} parent=1 // pred_region
      %s11 = ssub.s32 128, 128
      %12 = vsyncadd [#allocation4], %s11
      %s14 = sshll.u32 [#allocation3], 4
      %s15 = int_to_ptr.vmem [resolvable:$true] %s14
      %17 = dma.hbm_to_vmem [thread:$0]  %s0, 128, %s15, [#allocation4]
    $region5: #{tpu_custom_call.1} parent=1 // pred_fallthru
      _
    // Predicated region
    $region6: #{tpu_custom_call.1} parent=1 // pred_check
      _
    $region7: #{tpu_custom_call.1} parent=1 // pred_check_branch
      %19 = sbr.rel (0) target = $region9
    $region8: #{tpu_custom_call.1} parent=1 // pred_region
      %20 = dma.done [#allocation4], 128
    $region9: #{tpu_custom_call.1} parent=1 // pred_fallthru
      _
    %p21 = scmp.eq.s32.totalorder 0, 0
    // Predicated region
    $region10: #{tpu_custom_call.1} parent=1 // pred_check
      %p22 = pneg %p21
    $region11: #{tpu_custom_call.1} parent=1 // pred_check_branch
      %24 = sbr.rel (%p22) target = $region13
    $region12: #{tpu_custom_call.1} parent=1 // pred_region
      %25 = vst [vmem:[#allocation2] sm:$0xff] 0.0
    $region13: #{tpu_custom_call.1} parent=1 // pred_fallthru
      _
    %v26 = vld [vmem:[#allocation3] sm:$0xff]
    %v27 = vadd.f32 %v26, 0.0
    %v28 = vmul.f32 %v27, 0.1
    %v29 = vld [vmem:[#allocation2] sm:$0xff]
    %v30 = vmul.f32 %v29, 0.9
    %v31 = vadd.f32 %v30, %v28
    %vm32 = vcmp.gt.f32.partialorder %v31, 1.0
    %v33 = vsel %vm32, 1, 0
    %v34 = vcvt.s32.f32 %v33
    %35 = vst [vmem:[#allocation6] sm:$0xff] %v34
    %v36 = vsel %vm32, 0.0, %v31
    %v37 = vmul.f32 %v36, 0.9
    %v38 = vadd.f32 %v37, %v28
    %vm39 = vcmp.gt.f32.partialorder %v38, 1.0
    %v40 = vsel %vm39, 1, 0
    %v41 = vcvt.s32.f32 %v40
    %s42 = scalar_lea.vmem [#allocation6], 8
    %43 = vst [vmem:[%s42] sm:$0xff] %v41
    %v44 = vsel %vm39, 0.0, %v38
    %v45 = vmul.f32 %v44, 0.9
    %v46 = vadd.f32 %v45, %v28
    %vm47 = vcmp.gt.f32.partialorder %v46, 1.0
    %v48 = vsel %vm47, 1, 0
    %v49 = vcvt.s32.f32 %v48
    %s50 = scalar_lea.vmem [#allocation6], 16
    %51 = vst [vmem:[%s50] sm:$0xff] %v49
    %v52 = vsel %vm47, 0.0, %v46
    %v53 = vmul.f32 %v52, 0.9
    %v54 = vadd.f32 %v53, %v28
    %vm55 = vcmp.gt.f32.partialorder %v54, 1.0
    %v56 = vsel %vm55, 1, 0
    %v57 = vcvt.s32.f32 %v56
    %s58 = scalar_lea.vmem [#allocation6], 24
    %59 = vst [vmem:[%s58] sm:$0xff] %v57
    %v60 = vsel %vm55, 0.0, %v54
    %v61 = vmul.f32 %v60, 0.9
    %v62 = vadd.f32 %v61, %v28
    %vm63 = vcmp.gt.f32.partialorder %v62, 1.0
    %v64 = vsel %vm63, 1, 0
    %v65 = vcvt.s32.f32 %v64
    %s66 = scalar_lea.vmem [#allocation6], 32
    %67 = vst [vmem:[%s66] sm:$0xff] %v65
    %v68 = vsel %vm63, 0.0, %v62
    %v69 = vmul.f32 %v68, 0.9
    %v70 = vadd.f32 %v69, %v28
    %vm71 = vcmp.gt.f32.partialorder %v70, 1.0
    %v72 = vsel %vm71, 1, 0
    %v73 = vcvt.s32.f32 %v72
    %s74 = scalar_lea.vmem [#allocation6], 40
    %75 = vst [vmem:[%s74] sm:$0xff] %v73
    %v76 = vsel %vm71, 0.0, %v70
    %v77 = vmul.f32 %v76, 0.9
    %v78 = vadd.f32 %v77, %v28
    %vm79 = vcmp.gt.f32.partialorder %v78, 1.0
    %v80 = vsel %vm79, 1, 0
    %v81 = vcvt.s32.f32 %v80
    %s82 = scalar_lea.vmem [#allocation6], 48
    %83 = vst [vmem:[%s82] sm:$0xff] %v81
    %v84 = vsel %vm79, 0.0, %v78
    %v85 = vmul.f32 %v84, 0.9
    %v86 = vadd.f32 %v85, %v28
    %vm87 = vcmp.gt.f32.partialorder %v86, 1.0
    %v88 = vsel %vm87, 1, 0
    %v89 = vcvt.s32.f32 %v88
    %s90 = scalar_lea.vmem [#allocation6], 56
    %91 = vst [vmem:[%s90] sm:$0xff] %v89
    %v92 = vsel %vm87, 0.0, %v86
    %93 = vst [vmem:[#allocation2] sm:$0xff] %v92
    // Predicated region
    $region14: #{tpu_custom_call.1} parent=1 // pred_check
      _
    $region15: #{tpu_custom_call.1} parent=1 // pred_check_branch
      %95 = sbr.rel (0) target = $region17
    $region16: #{tpu_custom_call.1} parent=1 // pred_region
      %s97 = ssub.s32 1024, 1024
      %98 = vsyncadd [#allocation5], %s97
      %s99 = sshll.u32 [#allocation6], 4
      %s100 = int_to_ptr.vmem [resolvable:$true] %s99
      %105 = dma.vmem_to_hbm [thread:$0]  %s100, 1024, %s1, [#allocation5], 128, 128, 8
    $region17: #{tpu_custom_call.1} parent=1 // pred_fallthru
      _
    // Predicated region
    $region18: #{tpu_custom_call.1} parent=1 // pred_check
      _
    $region19: #{tpu_custom_call.1} parent=1 // pred_check_branch
      %107 = sbr.rel (0) target = $region21
    $region20: #{tpu_custom_call.1} parent=1 // pred_region
      %108 = dma.done [#allocation5], 1024
    $region21: #{tpu_custom_call.1} parent=1 // pred_fallthru
      _
    %109 = vsyncpa [#allocation4], 1
    %110 = vsyncpa [#allocation5], 1

</llo_original>
